<compile_context>
chip_gen: v7x
topology: tpu7x:2x2x1
jax: 0.10.0
libtpu: 0.0.40
codegen_flags: <defaults>
</compile_context>

<pallas_src>
import jax
import jax.numpy as jnp
from jax.experimental import pallas as pl
from jax.experimental.pallas import tpu as pltpu

IN_FEATURES = 93
NUM_CLASSES = 9
H1, H2, H3 = 512, 256, 128
PAD = 128            # lane-aligned padding for the 93-dim input and 9-dim output
BN_EPS = 1e-5


def _round_up(n, m):
    return ((n + m - 1) // m) * m


# --------------------------------------------------------------------------- #
# Kernel
# --------------------------------------------------------------------------- #
def otto_mlp_kernel(x_ref,
                    w1_ref, b1_ref,
                    w2_ref, b2_ref,
                    w3_ref, b3_ref,
                    w4_ref, b4_ref,
                    o_ref):
    """Fused 4-layer MLP on one batch tile. BN is pre-folded; Dropout is identity."""
    h = jnp.dot(x_ref[...], w1_ref[...],
                preferred_element_type=jnp.float32) + b1_ref[...]
    h = jnp.maximum(h, 0.0).astype(jnp.bfloat16)

    h = jnp.dot(h, w2_ref[...],
                preferred_element_type=jnp.float32) + b2_ref[...]
    h = jnp.maximum(h, 0.0).astype(jnp.bfloat16)

    h = jnp.dot(h, w3_ref[...],
                preferred_element_type=jnp.float32) + b3_ref[...]
    h = jnp.maximum(h, 0.0).astype(jnp.bfloat16)

    o_ref[...] = jnp.dot(h, w4_ref[...],
                         preferred_element_type=jnp.float32) + b4_ref[...]


# --------------------------------------------------------------------------- #
# Wrapper
# --------------------------------------------------------------------------- #
def otto_mlp_forward(x, kparams, *, block_b=512):
    """x: (B, 93) float32. Returns (B, 9) float32 logits.

    block_b: max rows per grid step (512 keeps activations + double buffers well
    under scoped VMEM on v5e/v6e/v7x while filling the 256-wide MXU).
    """
    (w1, b1, w2, b2, w3, b3, w4, b4) = kparams
    B = x.shape[0]

    B8 = max(8, _round_up(B, 8))          # sublane multiple
    TB = min(block_b, B8)                 # batch tile (rows per grid step)
    B_pad = _round_up(B8, TB)
    grid = (B_pad // TB,)

    # Pad batch rows and input features (93 -> 128) with zeros; cast to bf16.
    x_p = jnp.pad(x, ((0, B_pad - B), (0, PAD - IN_FEATURES))).astype(jnp.bfloat16)

    weights = (w1, b1, w2, b2, w3, b3, w4, b4)

    def const_spec(arr):
        # Full-shape block, constant index map -> loaded once, resident in VMEM.
        return pl.BlockSpec(arr.shape, lambda i: (0, 0))

    in_specs = [pl.BlockSpec((TB, PAD), lambda i: (i, 0))] + \
               [const_spec(a) for a in weights]
    out_spec = pl.BlockSpec((TB, PAD), lambda i: (i, 0))

    flops = 2 * B_pad * (PAD * H1 + H1 * H2 + H2 * H3 + H3 * PAD)
    bytes_accessed = (x_p.size * 2                      # bf16 input
                      + B_pad * PAD * 4                 # f32 output
                      + sum(int(a.size) * a.dtype.itemsize for a in weights))

    out_p = pl.pallas_call(
        otto_mlp_kernel,
        out_shape=jax.ShapeDtypeStruct((B_pad, PAD), jnp.float32),
        grid=grid,
        in_specs=in_specs,
        out_specs=out_spec,
        compiler_params=pltpu.CompilerParams(
            dimension_semantics=("parallel",),
            vmem_limit_bytes=32 * 1024 * 1024,
        ),
        cost_estimate=pl.CostEstimate(
            flops=flops, transcendentals=0, bytes_accessed=bytes_accessed),
    )(x_p, *weights)

    return out_p[:B, :NUM_CLASSES]


# --------------------------------------------------------------------------- #
# Parameters (PyTorch-default-like, deterministic) + BN folding / padding
# --------------------------------------------------------------------------- #
def init_params(key):
    """Raw (unfused, unpadded) parameters mirroring the PyTorch module."""
    keys = jax.random.split(key, 16)
    ki = iter(keys)

    def linear(fan_in, fan_out):
        bound = float(fan_in) ** -0.5
        w = jax.random.uniform(next(ki), (fan_in, fan_out), jnp.float32, -bound, bound)
        b = jax.random.uniform(next(ki), (fan_out,), jnp.float32, -bound, bound)
        return w, b

    def bn(dim):
        gamma = jnp.ones((dim,), jnp.float32)
        beta = jnp.zeros((dim,), jnp.float32)
        # non-trivial but deterministic running stats to exercise the BN fold
        mean = 0.1 * jax.random.normal(next(ki), (dim,), jnp.float32)
        var = 0.5 + jax.random.uniform(next(ki), (dim,), jnp.float32)
        return gamma, beta, mean, var

    l1 = linear(IN_FEATURES, H1); bn1 = bn(H1)
    l2 = linear(H1, H2);          bn2 = bn(H2)
    l3 = linear(H2, H3);          bn3 = bn(H3)
    l4 = linear(H3, NUM_CLASSES)
    return (l1, bn1, l2, bn2, l3, bn3, l4)


def fold_and_pad_params(raw):
    """Fold eval-mode BN into the preceding Linear, pad to lane width, cast weights
    to bf16 (biases stay f32 and are added to the f32 accumulator)."""
    (l1, bn1, l2, bn2, l3, bn3, l4) = raw

    def fold(lin, bn):
        w, b = lin
        g, be, m, v = bn
        scale = g * jax.lax.rsqrt(v + BN_EPS)          # (out,)
        return w * scale[None, :], (b - m) * scale + be

    w1, b1 = fold(l1, bn1)
    w2, b2 = fold(l2, bn2)
    w3, b3 = fold(l3, bn3)
    w4, b4 = l4

    # pad input features 93 -> 128 (zero rows contribute nothing)
    w1 = jnp.pad(w1, ((0, PAD - IN_FEATURES), (0, 0)))
    # pad output classes 9 -> 128 (zero cols / bias; sliced off after the kernel)
    w4 = jnp.pad(w4, ((0, 0), (0, PAD - NUM_CLASSES)))
    b4 = jnp.pad(b4, ((0, PAD - NUM_CLASSES),))

    def pack(w, b):
        return (w.astype(jnp.bfloat16), b.astype(jnp.float32).reshape(1, -1))

    return pack(w1, b1) + pack(w2, b2) + pack(w3, b3) + pack(w4, b4)


# --------------------------------------------------------------------------- #
# References
# --------------------------------------------------------------------------- #
def reference_forward_f32(x, raw):
    """Pure-JAX f32 reference with module semantics (Linear -> BN(eval) -> ReLU)."""
    (l1, bn1, l2, bn2, l3, bn3, l4) = raw

    def bn_relu(h, bn):
        g, be, m, v = bn
        return jnp.maximum((h - m) * jax.lax.rsqrt(v + BN_EPS) * g + be, 0.0)

    h = bn_relu(x @ l1[0] + l1[1], bn1)
    h = bn_relu(h @ l2[0] + l2[1], bn2)
    h = bn_relu(h @ l3[0] + l3[1], bn3)
    return h @ l4[0] + l4[1]


def reference_forward_mimic(x, kparams):
    """Pure-JAX reference with the same folded-bf16 math as the kernel."""
    (w1, b1, w2, b2, w3, b3, w4, b4) = kparams
    xp = jnp.pad(x, ((0, 0), (0, PAD - IN_FEATURES))).astype(jnp.bfloat16)
    h = jnp.dot(xp, w1, preferred_element_type=jnp.float32) + b1
    h = jnp.maximum(h, 0.0).astype(jnp.bfloat16)
    h = jnp.dot(h, w2, preferred_element_type=jnp.float32) + b2
    h = jnp.maximum(h, 0.0).astype(jnp.bfloat16)
    h = jnp.dot(h, w3, preferred_element_type=jnp.float32) + b3
    h = jnp.maximum(h, 0.0).astype(jnp.bfloat16)
    out = jnp.dot(h, w4, preferred_element_type=jnp.float32) + b4
    return out[:, :NUM_CLASSES]


# --------------------------------------------------------------------------- #
if __name__ == "__main__":
    key = jax.random.PRNGKey(0)
    k_param, k_x = jax.random.split(key)

    raw = init_params(k_param)
    kparams = fold_and_pad_params(raw)

    # Small latency-style batch.
    B = 8
    x = jax.random.normal(k_x, (B, IN_FEATURES), jnp.float32)
    out = jax.block_until_ready(otto_mlp_forward(x, kparams))
    assert out.shape == (B, NUM_CLASSES)

    ref_mimic = reference_forward_mimic(x, kparams)
    ref_f32 = reference_forward_f32(x, raw)
    assert jnp.allclose(out, ref_mimic, atol=1e-2, rtol=1e-2)
    assert jnp.allclose(out, ref_f32, atol=7e-2, rtol=7e-2)  # bf16 tolerance

    # Exercise the batch grid (multiple tiles + padded tail rows).
    B2 = 300
    x2 = jax.random.normal(jax.random.PRNGKey(1), (B2, IN_FEATURES), jnp.float32)
    out2 = jax.block_until_ready(otto_mlp_forward(x2, kparams, block_b=128))
    assert out2.shape == (B2, NUM_CLASSES)
    assert jnp.allclose(out2, reference_forward_mimic(x2, kparams),
                        atol=1e-2, rtol=1e-2)

    print("KERNEL_OK")
</pallas_src>

<mosaic_0001>
module attributes {stable_mosaic.version = 11 : i64} {
  func.func @otto_mlp_kernel(%arg0: i32, %arg1: memref<8x128xbf16, #tpu.memory_space<vmem>>, %arg2: memref<128x512xbf16, #tpu.memory_space<vmem>>, %arg3: memref<1x512xf32, #tpu.memory_space<vmem>>, %arg4: memref<512x256xbf16, #tpu.memory_space<vmem>>, %arg5: memref<1x256xf32, #tpu.memory_space<vmem>>, %arg6: memref<256x128xbf16, #tpu.memory_space<vmem>>, %arg7: memref<1x128xf32, #tpu.memory_space<vmem>>, %arg8: memref<128x128xbf16, #tpu.memory_space<vmem>>, %arg9: memref<1x128xf32, #tpu.memory_space<vmem>>, %arg10: memref<8x128xf32, #tpu.memory_space<vmem>>) attributes {dimension_semantics = [#tpu.dimension_semantics<parallel>], iteration_bounds = array<i64: 1>, scalar_prefetch = 0 : i64, scratch_operands = 0 : i64, tpu.core_type = #tpu.core_type<tc>, window_params = [{transform_indices = @transform_0, window_bounds = array<i64: 8, 128>}, {pipeline_mode = #tpu.pipeline_mode<synchronous>, transform_indices = @transform_1, window_bounds = array<i64: 128, 512>}, {pipeline_mode = #tpu.pipeline_mode<synchronous>, transform_indices = @transform_2, window_bounds = array<i64: 1, 512>}, {pipeline_mode = #tpu.pipeline_mode<synchronous>, transform_indices = @transform_3, window_bounds = array<i64: 512, 256>}, {pipeline_mode = #tpu.pipeline_mode<synchronous>, transform_indices = @transform_4, window_bounds = array<i64: 1, 256>}, {pipeline_mode = #tpu.pipeline_mode<synchronous>, transform_indices = @transform_5, window_bounds = array<i64: 256, 128>}, {pipeline_mode = #tpu.pipeline_mode<synchronous>, transform_indices = @transform_6, window_bounds = array<i64: 1, 128>}, {pipeline_mode = #tpu.pipeline_mode<synchronous>, transform_indices = @transform_7, window_bounds = array<i64: 128, 128>}, {pipeline_mode = #tpu.pipeline_mode<synchronous>, transform_indices = @transform_8, window_bounds = array<i64: 1, 128>}, {transform_indices = @transform_9, window_bounds = array<i64: 8, 128>}]} {
    %c0 = arith.constant 0 : index
    %c0_0 = arith.constant 0 : index
    %0 = vector.load %arg1[%c0, %c0_0] : memref<8x128xbf16, #tpu.memory_space<vmem>>, vector<8x128xbf16>
    %c0_1 = arith.constant 0 : index
    %c0_2 = arith.constant 0 : index
    %1 = vector.load %arg2[%c0_1, %c0_2] : memref<128x512xbf16, #tpu.memory_space<vmem>>, vector<128x512xbf16>
    %cst = arith.constant dense<0.000000e+00> : vector<8x512xf32>
    %2 = tpu.matmul %0, %1, %cst {dimension_numbers = #tpu.dot_dimension_numbers<[1], [0], [0], [1], [0, 0, 1, 1], [], []>} : vector<8x128xbf16>, vector<128x512xbf16>, vector<8x512xf32> -> vector<8x512xf32>
    %c0_3 = arith.constant 0 : index
    %c0_4 = arith.constant 0 : index
    %3 = vector.load %arg3[%c0_3, %c0_4] : memref<1x512xf32, #tpu.memory_space<vmem>>, vector<1x512xf32>
    %4 = vector.broadcast %3 : vector<1x512xf32> to vector<8x512xf32>
    %5 = arith.addf %2, %4 : vector<8x512xf32>
    %cst_5 = arith.constant 0.000000e+00 : f32
    %6 = vector.broadcast %cst_5 : f32 to vector<8x512xf32>
    %7 = arith.maximumf %5, %6 : vector<8x512xf32>
    %8 = arith.truncf %7 : vector<8x512xf32> to vector<8x512xbf16>
    %c0_6 = arith.constant 0 : index
    %c0_7 = arith.constant 0 : index
    %9 = vector.load %arg4[%c0_6, %c0_7] : memref<512x256xbf16, #tpu.memory_space<vmem>>, vector<512x256xbf16>
    %cst_8 = arith.constant dense<0.000000e+00> : vector<8x256xf32>
    %10 = tpu.matmul %8, %9, %cst_8 {dimension_numbers = #tpu.dot_dimension_numbers<[1], [0], [0], [1], [0, 0, 1, 1], [], []>} : vector<8x512xbf16>, vector<512x256xbf16>, vector<8x256xf32> -> vector<8x256xf32>
    %c0_9 = arith.constant 0 : index
    %c0_10 = arith.constant 0 : index
    %11 = vector.load %arg5[%c0_9, %c0_10] : memref<1x256xf32, #tpu.memory_space<vmem>>, vector<1x256xf32>
    %12 = vector.broadcast %11 : vector<1x256xf32> to vector<8x256xf32>
    %13 = arith.addf %10, %12 : vector<8x256xf32>
    %cst_11 = arith.constant 0.000000e+00 : f32
    %14 = vector.broadcast %cst_11 : f32 to vector<8x256xf32>
    %15 = arith.maximumf %13, %14 : vector<8x256xf32>
    %16 = arith.truncf %15 : vector<8x256xf32> to vector<8x256xbf16>
    %c0_12 = arith.constant 0 : index
    %c0_13 = arith.constant 0 : index
    %17 = vector.load %arg6[%c0_12, %c0_13] : memref<256x128xbf16, #tpu.memory_space<vmem>>, vector<256x128xbf16>
    %cst_14 = arith.constant dense<0.000000e+00> : vector<8x128xf32>
    %18 = tpu.matmul %16, %17, %cst_14 {dimension_numbers = #tpu.dot_dimension_numbers<[1], [0], [0], [1], [0, 0, 1, 1], [], []>} : vector<8x256xbf16>, vector<256x128xbf16>, vector<8x128xf32> -> vector<8x128xf32>
    %c0_15 = arith.constant 0 : index
    %c0_16 = arith.constant 0 : index
    %19 = vector.load %arg7[%c0_15, %c0_16] : memref<1x128xf32, #tpu.memory_space<vmem>>, vector<1x128xf32>
    %20 = vector.broadcast %19 : vector<1x128xf32> to vector<8x128xf32>
    %21 = arith.addf %18, %20 : vector<8x128xf32>
    %cst_17 = arith.constant 0.000000e+00 : f32
    %22 = vector.broadcast %cst_17 : f32 to vector<8x128xf32>
    %23 = arith.maximumf %21, %22 : vector<8x128xf32>
    %24 = arith.truncf %23 : vector<8x128xf32> to vector<8x128xbf16>
    %c0_18 = arith.constant 0 : index
    %c0_19 = arith.constant 0 : index
    %25 = vector.load %arg8[%c0_18, %c0_19] : memref<128x128xbf16, #tpu.memory_space<vmem>>, vector<128x128xbf16>
    %cst_20 = arith.constant dense<0.000000e+00> : vector<8x128xf32>
    %26 = tpu.matmul %24, %25, %cst_20 {dimension_numbers = #tpu.dot_dimension_numbers<[1], [0], [0], [1], [0, 0, 1, 1], [], []>} : vector<8x128xbf16>, vector<128x128xbf16>, vector<8x128xf32> -> vector<8x128xf32>
    %c0_21 = arith.constant 0 : index
    %c0_22 = arith.constant 0 : index
    %27 = vector.load %arg9[%c0_21, %c0_22] : memref<1x128xf32, #tpu.memory_space<vmem>>, vector<1x128xf32>
    %28 = vector.broadcast %27 : vector<1x128xf32> to vector<8x128xf32>
    %29 = arith.addf %26, %28 : vector<8x128xf32>
    %c0_23 = arith.constant 0 : index
    %c0_24 = arith.constant 0 : index
    %30 = vector.load %arg10[%c0_23, %c0_24] : memref<8x128xf32, #tpu.memory_space<vmem>>, vector<8x128xf32>
    tpu.vector_store %arg10[%c0_23, %c0_24], %29 {strides = array<i32>} : memref<8x128xf32, #tpu.memory_space<vmem>>, vector<8x128xf32>,
    return
  }
  func.func @transform_0(%arg0: i32) -> (i32, i32) {
    %c0_i32 = arith.constant 0 : i32
    %c0_i32_0 = arith.constant 0 : i32
    return %arg0, %c0_i32 : i32, i32
  }
  func.func @transform_1(%arg0: i32) -> (i32, i32) {
    %c0_i32 = arith.constant 0 : i32
    %c0_i32_0 = arith.constant 0 : i32
    %c0_i32_1 = arith.constant 0 : i32
    return %c0_i32, %c0_i32_0 : i32, i32
  }
  func.func @transform_2(%arg0: i32) -> (i32, i32) {
    %c0_i32 = arith.constant 0 : i32
    %c0_i32_0 = arith.constant 0 : i32
    %c0_i32_1 = arith.constant 0 : i32
    return %c0_i32, %c0_i32_0 : i32, i32
  }
  func.func @transform_3(%arg0: i32) -> (i32, i32) {
    %c0_i32 = arith.constant 0 : i32
    %c0_i32_0 = arith.constant 0 : i32
    %c0_i32_1 = arith.constant 0 : i32
    return %c0_i32, %c0_i32_0 : i32, i32
  }
  func.func @transform_4(%arg0: i32) -> (i32, i32) {
    %c0_i32 = arith.constant 0 : i32
    %c0_i32_0 = arith.constant 0 : i32
    %c0_i32_1 = arith.constant 0 : i32
    return %c0_i32, %c0_i32_0 : i32, i32
  }
  func.func @transform_5(%arg0: i32) -> (i32, i32) {
    %c0_i32 = arith.constant 0 : i32
    %c0_i32_0 = arith.constant 0 : i32
    %c0_i32_1 = arith.constant 0 : i32
    return %c0_i32, %c0_i32_0 : i32, i32
  }
  func.func @transform_6(%arg0: i32) -> (i32, i32) {
    %c0_i32 = arith.constant 0 : i32
    %c0_i32_0 = arith.constant 0 : i32
    %c0_i32_1 = arith.constant 0 : i32
    return %c0_i32, %c0_i32_0 : i32, i32
  }
  func.func @transform_7(%arg0: i32) -> (i32, i32) {
    %c0_i32 = arith.constant 0 : i32
    %c0_i32_0 = arith.constant 0 : i32
    %c0_i32_1 = arith.constant 0 : i32
    return %c0_i32, %c0_i32_0 : i32, i32
  }
  func.func @transform_8(%arg0: i32) -> (i32, i32) {
    %c0_i32 = arith.constant 0 : i32
    %c0_i32_0 = arith.constant 0 : i32
    %c0_i32_1 = arith.constant 0 : i32
    return %c0_i32, %c0_i32_0 : i32, i32
  }
  func.func @transform_9(%arg0: i32) -> (i32, i32) {
    %c0_i32 = arith.constant 0 : i32
    %c0_i32_0 = arith.constant 0 : i32
    return %arg0, %c0_i32 : i32, i32
  }
}

</mosaic_0001>

<llo_original>
// kernel: tpu_custom_call.1
$region0: #{tpu_custom_call.1}
  #allocation0 [shape = 'u32[]', space=smem, size = 0x4, offset = 0x4, fixed_abs, tag = 'smem constant byte address 0x4 - core index']
  #allocation1 [shape = 'u32[144,128]{1,0:T(1,128)}', space=vmem, size = 0x12000, scoped, tag = 'internal scratch']
  %s0 = inlined_call_operand.hbm [shape: bf16[8,128], index: 0, kind: input, shape index: {}]
  %s1 = inlined_call_operand.hbm [shape: bf16[128,512], index: 1, kind: input, shape index: {}]
  %s2 = inlined_call_operand.vmem [shape: f32[1,512], index: 2, kind: input, shape index: {}]
  %s3 = inlined_call_operand.hbm [shape: bf16[512,256], index: 3, kind: input, shape index: {}]
  %s4 = inlined_call_operand.vmem [shape: f32[1,256], index: 4, kind: input, shape index: {}]
  %s5 = inlined_call_operand.hbm [shape: bf16[256,128], index: 5, kind: input, shape index: {}]
  %s6 = inlined_call_operand.vmem [shape: f32[1,128], index: 6, kind: input, shape index: {}]
  %s7 = inlined_call_operand.hbm [shape: bf16[128,128], index: 7, kind: input, shape index: {}]
  %s8 = inlined_call_operand.vmem [shape: f32[1,128], index: 8, kind: input, shape index: {}]
  %s9 = inlined_call_operand.hbm [shape: f32[8,128], index: 9, kind: output, shape index: {}]
  %s10 = sld [smem:[#allocation0]]
  $region66: #{tpu_custom_call.1} parent=0
    _
  %s12 = ssub.s32 1, %s10
  %s13 = scalar_select 0, %s12, %s10
  $region1: #{tpu_custom_call.1} parent=0
    #allocation2 [shape = 'u8[2048]{0}', space=vmem, size = 0x800, scoped, tag = 'input window, operand 0, single buffered']
    #allocation3 [shape = 's32[1]{0}', space=sflag, size = 0x4, scoped, tag = 'scoped memory for tpu_custom_call.1']
    #allocation4 [shape = 's32[1]{0}', space=sflag, size = 0x4, scoped, tag = 'scoped memory for tpu_custom_call.1']
    #allocation5 [shape = 'u8[131072]{0}', space=vmem, size = 0x20000, scoped, tag = 'input window, operand 1, single buffered']
    #allocation6 [shape = 's32[1]{0}', space=sflag, size = 0x4, scoped, tag = 'scoped memory for tpu_custom_call.1']
    #allocation7 [shape = 'u8[262144]{0}', space=vmem, size = 0x40000, scoped, tag = 'input window, operand 3, single buffered']
    #allocation8 [shape = 'u8[65536]{0}', space=vmem, size = 0x10000, scoped, tag = 'input window, operand 5, single buffered']
    #allocation9 [shape = 's32[1]{0}', space=sflag, size = 0x4, scoped, tag = 'scoped memory for tpu_custom_call.1']
    #allocation10 [shape = 'u8[32768]{0}', space=vmem, size = 0x8000, scoped, tag = 'input window, operand 7, single buffered']
    #allocation11 [shape = 'u8[4096]{0}', space=vmem, size = 0x1000, scoped, tag = 'output window, operand 0, single buffered']
    %14 = vsyncpa [#allocation3], 0
    %15 = vsyncpa [#allocation6], 0
    %16 = vsyncpa [#allocation9], 0
    %17 = vsyncpa [#allocation4], 0
    // Predicated region
    $region2: #{tpu_custom_call.1} parent=1 // pred_check
      _
    $region3: #{tpu_custom_call.1} parent=1 // pred_check_branch
      %19 = sbr.rel (0) target = $region5
    $region4: #{tpu_custom_call.1} parent=1 // pred_region
      %s21 = ssub.s32 64, 64
      %22 = vsyncadd [#allocation3], %s21
      %s24 = sshll.u32 [#allocation2], 4
      %s25 = int_to_ptr.vmem [resolvable:$true] %s24
      %27 = dma.hbm_to_vmem [thread:$0]  %s0, 64, %s25, [#allocation3]
    $region5: #{tpu_custom_call.1} parent=1 // pred_fallthru
      _
    // Predicated region
    $region6: #{tpu_custom_call.1} parent=1 // pred_check
      _
    $region7: #{tpu_custom_call.1} parent=1 // pred_check_branch
      %29 = sbr.rel (0) target = $region9
    $region8: #{tpu_custom_call.1} parent=1 // pred_region
      %s31 = ssub.s32 4096, 4096
      %32 = vsyncadd [#allocation6], %s31
      %s33 = sshll.u32 [#allocation5], 4
      %s34 = int_to_ptr.vmem [resolvable:$true] %s33
      %39 = dma.hbm_to_vmem [thread:$0]  %s1, 4096, %s34, [#allocation6], 256, 256, 16
    $region9: #{tpu_custom_call.1} parent=1 // pred_fallthru
      _
    // Predicated region
    $region10: #{tpu_custom_call.1} parent=1 // pred_check
      _
    $region11: #{tpu_custom_call.1} parent=1 // pred_check_branch
      %41 = sbr.rel (0) target = $region13
    $region12: #{tpu_custom_call.1} parent=1 // pred_region
      _
    $region13: #{tpu_custom_call.1} parent=1 // pred_fallthru
      _
    // Predicated region
    $region14: #{tpu_custom_call.1} parent=1 // pred_check
      _
    $region15: #{tpu_custom_call.1} parent=1 // pred_check_branch
      %43 = sbr.rel (0) target = $region17
    $region16: #{tpu_custom_call.1} parent=1 // pred_region
      %s45 = ssub.s32 8192, 8192
      %46 = vsyncadd [#allocation6], %s45
      %s47 = sshll.u32 [#allocation7], 4
      %s48 = int_to_ptr.vmem [resolvable:$true] %s47
      %53 = dma.hbm_to_vmem [thread:$0]  %s3, 8192, %s48, [#allocation6], 128, 128, 8
    $region17: #{tpu_custom_call.1} parent=1 // pred_fallthru
      _
    // Predicated region
    $region18: #{tpu_custom_call.1} parent=1 // pred_check
      _
    $region19: #{tpu_custom_call.1} parent=1 // pred_check_branch
      %55 = sbr.rel (0) target = $region21
    $region20: #{tpu_custom_call.1} parent=1 // pred_region
      _
    $region21: #{tpu_custom_call.1} parent=1 // pred_fallthru
      _
    // Predicated region
    $region22: #{tpu_custom_call.1} parent=1 // pred_check
      _
    $region23: #{tpu_custom_call.1} parent=1 // pred_check_branch
      %57 = sbr.rel (0) target = $region25
    $region24: #{tpu_custom_call.1} parent=1 // pred_region
      %s59 = ssub.s32 2048, 2048
      %60 = vsyncadd [#allocation9], %s59
      %s61 = sshll.u32 [#allocation8], 4
      %s62 = int_to_ptr.vmem [resolvable:$true] %s61
      %67 = dma.hbm_to_vmem [thread:$0]  %s5, 2048, %s62, [#allocation9], 64, 64, 4
    $region25: #{tpu_custom_call.1} parent=1 // pred_fallthru
      _
    // Predicated region
    $region26: #{tpu_custom_call.1} parent=1 // pred_check
      _
    $region27: #{tpu_custom_call.1} parent=1 // pred_check_branch
      %69 = sbr.rel (0) target = $region29
    $region28: #{tpu_custom_call.1} parent=1 // pred_region
      _
    $region29: #{tpu_custom_call.1} parent=1 // pred_fallthru
      _
    // Predicated region
    $region30: #{tpu_custom_call.1} parent=1 // pred_check
      _
    $region31: #{tpu_custom_call.1} parent=1 // pred_check_branch
      %71 = sbr.rel (0) target = $region33
    $region32: #{tpu_custom_call.1} parent=1 // pred_region
      %s73 = ssub.s32 1024, 1024
      %74 = vsyncadd [#allocation9], %s73
      %s75 = sshll.u32 [#allocation10], 4
      %s76 = int_to_ptr.vmem [resolvable:$true] %s75
      %81 = dma.hbm_to_vmem [thread:$0]  %s7, 1024, %s76, [#allocation9], 64, 64, 4
    $region33: #{tpu_custom_call.1} parent=1 // pred_fallthru
      _
    // Predicated region
    $region34: #{tpu_custom_call.1} parent=1 // pred_check
      _
    $region35: #{tpu_custom_call.1} parent=1 // pred_check_branch
      %83 = sbr.rel (0) target = $region37
    $region36: #{tpu_custom_call.1} parent=1 // pred_region
      _
    $region37: #{tpu_custom_call.1} parent=1 // pred_fallthru
      _
    // Predicated region
    $region38: #{tpu_custom_call.1} parent=1 // pred_check
      _
    $region39: #{tpu_custom_call.1} parent=1 // pred_check_branch
      %85 = sbr.rel (0) target = $region41
    $region40: #{tpu_custom_call.1} parent=1 // pred_region
      %86 = dma.done [#allocation3], 64
    $region41: #{tpu_custom_call.1} parent=1 // pred_fallthru
      _
    // Predicated region
    $region42: #{tpu_custom_call.1} parent=1 // pred_check
      _
    $region43: #{tpu_custom_call.1} parent=1 // pred_check_branch
      %88 = sbr.rel (0) target = $region45
    $region44: #{tpu_custom_call.1} parent=1 // pred_region
      %89 = dma.done [#allocation6], 4096
    $region45: #{tpu_custom_call.1} parent=1 // pred_fallthru
      _
    // Predicated region
    $region46: #{tpu_custom_call.1} parent=1 // pred_check
      _
    $region47: #{tpu_custom_call.1} parent=1 // pred_check_branch
      %91 = sbr.rel (0) target = $region49
    $region48: #{tpu_custom_call.1} parent=1 // pred_region
      %92 = dma.done [#allocation6], 8192
    $region49: #{tpu_custom_call.1} parent=1 // pred_fallthru
      _
    // Predicated region
    $region50: #{tpu_custom_call.1} parent=1 // pred_check
      _
    $region51: #{tpu_custom_call.1} parent=1 // pred_check_branch
      %94 = sbr.rel (0) target = $region53
    $region52: #{tpu_custom_call.1} parent=1 // pred_region
      %95 = dma.done [#allocation9], 2048
    $region53: #{tpu_custom_call.1} parent=1 // pred_fallthru
      _
    // Predicated region
    $region54: #{tpu_custom_call.1} parent=1 // pred_check
      _
    $region55: #{tpu_custom_call.1} parent=1 // pred_check_branch
      %97 = sbr.rel (0) target = $region57
    $region56: #{tpu_custom_call.1} parent=1 // pred_region
      %98 = dma.done [#allocation9], 1024
    $region57: #{tpu_custom_call.1} parent=1 // pred_fallthru
      _
    %v100 = vld [vmem:[#allocation2] sm:$0xf]
    %v101 = vld [vmem:[#allocation5] sm:$0xff]
    %v102 = vld [vmem:[#allocation5 + $0x8] sm:$0xff]
    %v103 = vld [vmem:[#allocation5 + $0x10] sm:$0xff]
    %v104 = vld [vmem:[#allocation5 + $0x18] sm:$0xff]
    %v105 = vld [vmem:[#allocation5 + $0x20] sm:$0xff]
    %v106 = vld [vmem:[#allocation5 + $0x28] sm:$0xff]
    %v107 = vld [vmem:[#allocation5 + $0x30] sm:$0xff]
    %v108 = vld [vmem:[#allocation5 + $0x38] sm:$0xff]
    %v109 = vld [vmem:[#allocation5 + $0x40] sm:$0xff]
    %v110 = vld [vmem:[#allocation5 + $0x48] sm:$0xff]
    %v111 = vld [vmem:[#allocation5 + $0x50] sm:$0xff]
    %v112 = vld [vmem:[#allocation5 + $0x58] sm:$0xff]
    %v113 = vld [vmem:[#allocation5 + $0x60] sm:$0xff]
    %v114 = vld [vmem:[#allocation5 + $0x68] sm:$0xff]
    %v115 = vld [vmem:[#allocation5 + $0x70] sm:$0xff]
    %v116 = vld [vmem:[#allocation5 + $0x78] sm:$0xff]
    %v117 = vld [vmem:[#allocation5 + $0x80] sm:$0xff]
    %v118 = vld [vmem:[#allocation5 + $0x88] sm:$0xff]
    %v119 = vld [vmem:[#allocation5 + $0x90] sm:$0xff]
    %v120 = vld [vmem:[#allocation5 + $0x98] sm:$0xff]
    %v121 = vld [vmem:[#allocation5 + $0xa0] sm:$0xff]
    %v122 = vld [vmem:[#allocation5 + $0xa8] sm:$0xff]
    %v123 = vld [vmem:[#allocation5 + $0xb0] sm:$0xff]
    %v124 = vld [vmem:[#allocation5 + $0xb8] sm:$0xff]
    %v125 = vld [vmem:[#allocation5 + $0xc0] sm:$0xff]
    %v126 = vld [vmem:[#allocation5 + $0xc8] sm:$0xff]
    %v127 = vld [vmem:[#allocation5 + $0xd0] sm:$0xff]
    %v128 = vld [vmem:[#allocation5 + $0xd8] sm:$0xff]
    %v129 = vld [vmem:[#allocation5 + $0xe0] sm:$0xff]
    %v130 = vld [vmem:[#allocation5 + $0xe8] sm:$0xff]
    %v131 = vld [vmem:[#allocation5 + $0xf0] sm:$0xff]
    %v132 = vld [vmem:[#allocation5 + $0xf8] sm:$0xff]
    %v133 = vld [vmem:[%s2] sm:$0xf]
    %v135 = vlaneseq
    %v136 = vshrl.u32 %v135, 7
    %v137 = vsub.s32 0, %v136
    %v138 = vrot.slane %v133, %v137
    %v139 = vlaneseq
    %v140 = vshrl.u32 %v139, 7
    %v141 = vsub.s32 1, %v140
    %v142 = vrot.slane %v133, %v141
    %v143 = vlaneseq
    %v144 = vshrl.u32 %v143, 7
    %v145 = vsub.s32 2, %v144
    %v146 = vrot.slane %v133, %v145
    %v147 = vlaneseq
    %v148 = vshrl.u32 %v147, 7
    %v149 = vsub.s32 3, %v148
    %v150 = vrot.slane %v133, %v149
    %v187 = vunpack.c.l.b16 %v101
    %v188 = vunpack.c.h.b16 %v101
    %v189 = vunpack.c.l.b16 %v102
    %v190 = vunpack.c.h.b16 %v102
    %v191 = vunpack.c.l.b16 %v103
    %v192 = vunpack.c.h.b16 %v103
    %v193 = vunpack.c.l.b16 %v104
    %v194 = vunpack.c.h.b16 %v104
    %v195 = vunpack.c.l.b16 %v105
    %v196 = vunpack.c.h.b16 %v105
    %v197 = vunpack.c.l.b16 %v106
    %v198 = vunpack.c.h.b16 %v106
    %v199 = vunpack.c.l.b16 %v107
    %v200 = vunpack.c.h.b16 %v107
    %v201 = vunpack.c.l.b16 %v108
    %v202 = vunpack.c.h.b16 %v108
    %v203 = vunpack.c.l.b16 %v109
    %v204 = vunpack.c.h.b16 %v109
    %v205 = vunpack.c.l.b16 %v110
    %v206 = vunpack.c.h.b16 %v110
    %v207 = vunpack.c.l.b16 %v111
    %v208 = vunpack.c.h.b16 %v111
    %v209 = vunpack.c.l.b16 %v112
    %v210 = vunpack.c.h.b16 %v112
    %v211 = vunpack.c.l.b16 %v113
    %v212 = vunpack.c.h.b16 %v113
    %v213 = vunpack.c.l.b16 %v114
    %v214 = vunpack.c.h.b16 %v114
    %v215 = vunpack.c.l.b16 %v115
    %v216 = vunpack.c.h.b16 %v115
    %v217 = vunpack.c.l.b16 %v116
    %v218 = vunpack.c.h.b16 %v116
    %v219 = vunpack.c.l.b16 %v117
    %v220 = vunpack.c.h.b16 %v117
    %v221 = vunpack.c.l.b16 %v118
    %v222 = vunpack.c.h.b16 %v118
    %v223 = vunpack.c.l.b16 %v119
    %v224 = vunpack.c.h.b16 %v119
    %v225 = vunpack.c.l.b16 %v120
    %v226 = vunpack.c.h.b16 %v120
    %v227 = vunpack.c.l.b16 %v121
    %v228 = vunpack.c.h.b16 %v121
    %v229 = vunpack.c.l.b16 %v122
    %v230 = vunpack.c.h.b16 %v122
    %v231 = vunpack.c.l.b16 %v123
    %v232 = vunpack.c.h.b16 %v123
    %v233 = vunpack.c.l.b16 %v124
    %v234 = vunpack.c.h.b16 %v124
    %v235 = vunpack.c.l.b16 %v125
    %v236 = vunpack.c.h.b16 %v125
    %v237 = vunpack.c.l.b16 %v126
    %v238 = vunpack.c.h.b16 %v126
    %v239 = vunpack.c.l.b16 %v127
    %v240 = vunpack.c.h.b16 %v127
    %v241 = vunpack.c.l.b16 %v128
    %v242 = vunpack.c.h.b16 %v128
    %v243 = vunpack.c.l.b16 %v129
    %v244 = vunpack.c.h.b16 %v129
    %v245 = vunpack.c.l.b16 %v130
    %v246 = vunpack.c.h.b16 %v130
    %v247 = vunpack.c.l.b16 %v131
    %v248 = vunpack.c.h.b16 %v131
    %v249 = vunpack.c.l.b16 %v132
    %v250 = vunpack.c.h.b16 %v132
    %v251 = vpack.c.b16 %v191, %v187
    %v252 = vpack.c.b16 %v192, %v188
    %v253 = vpack.c.b16 %v193, %v189
    %v254 = vpack.c.b16 %v194, %v190
    %v255 = vpack.c.b16 %v199, %v195
    %v256 = vpack.c.b16 %v200, %v196
    %v257 = vpack.c.b16 %v201, %v197
    %v258 = vpack.c.b16 %v202, %v198
    %v259 = vpack.c.b16 %v207, %v203
    %v260 = vpack.c.b16 %v208, %v204
    %v261 = vpack.c.b16 %v209, %v205
    %v262 = vpack.c.b16 %v210, %v206
    %v263 = vpack.c.b16 %v215, %v211
    %v264 = vpack.c.b16 %v216, %v212
    %v265 = vpack.c.b16 %v217, %v213
    %v266 = vpack.c.b16 %v218, %v214
    %v267 = vpack.c.b16 %v223, %v219
    %v268 = vpack.c.b16 %v224, %v220
    %v269 = vpack.c.b16 %v225, %v221
    %v270 = vpack.c.b16 %v226, %v222
    %v271 = vpack.c.b16 %v231, %v227
    %v272 = vpack.c.b16 %v232, %v228
    %v273 = vpack.c.b16 %v233, %v229
    %v274 = vpack.c.b16 %v234, %v230
    %v275 = vpack.c.b16 %v239, %v235
    %v276 = vpack.c.b16 %v240, %v236
    %v277 = vpack.c.b16 %v241, %v237
    %v278 = vpack.c.b16 %v242, %v238
    %v279 = vpack.c.b16 %v247, %v243
    %v280 = vpack.c.b16 %v248, %v244
    %v281 = vpack.c.b16 %v249, %v245
    %v282 = vpack.c.b16 %v250, %v246
    %315 = vmatprep.subr.bf16.mxu0 %v252
    %316 = vmatpush1.bf16.msra.mxu0 %v251
    %317 = vmatprep.subr.bf16.mxu0 %v256
    %318 = vmatpush1.bf16.msra.mxu0 %v255
    %319 = vmatprep.subr.bf16.mxu0 %v260
    %320 = vmatpush1.bf16.msra.mxu0 %v259
    %321 = vmatprep.subr.bf16.mxu0 %v264
    %322 = vmatpush1.bf16.msra.mxu0 %v263
    %323 = vmatprep.subr.bf16.mxu0 %v268
    %324 = vmatpush1.bf16.msra.mxu0 %v267
    %325 = vmatprep.subr.bf16.mxu0 %v272
    %326 = vmatpush1.bf16.msra.mxu0 %v271
    %327 = vmatprep.subr.bf16.mxu0 %v276
    %328 = vmatpush1.bf16.msra.mxu0 %v275
    %329 = vmatprep.subr.bf16.mxu0 %v280
    %330 = vmatpush1.bf16.msra.mxu0 %v279
    %331 = vmatprep.subr.bf16.mxu0 0
    %332 = vmatpush1.bf16.msra.mxu0 0
    %333 = vmatprep.subr.bf16.mxu0 0
    %334 = vmatpush1.bf16.msra.mxu0 0
    %335 = vmatprep.subr.bf16.mxu0 0
    %336 = vmatpush1.bf16.msra.mxu0 0
    %337 = vmatprep.subr.bf16.mxu0 0
    %338 = vmatpush1.bf16.msra.mxu0 0
    %339 = vmatprep.subr.bf16.mxu0 0
    %340 = vmatpush1.bf16.msra.mxu0 0
    %341 = vmatprep.subr.bf16.mxu0 0
    %342 = vmatpush1.bf16.msra.mxu0 0
    %343 = vmatprep.subr.bf16.mxu0 0
    %344 = vmatpush1.bf16.msra.mxu0 0
    %345 = vmatprep.subr.bf16.mxu0 0
    %346 = vmatpush1.bf16.msra.mxu0 0
    %347 = vmatprep.mubr.bf16.mxu0 0
    %348 = vmatmul.mubr.bf16.gmra.mrb[0].mxu0 %v100
    %v349 = vpop.f32.mrb[0].mxu0
    %v350 = vadd.f32 %v138, %v349
    %v351 = vpop.f32.mrb[0].mxu0
    %v352 = vadd.f32 %v142, %v351
    %v353 = vpop.f32.mrb[0].mxu0
    %v354 = vpop.f32.mrb[0].mxu0
    %355 = vdwg.mxu0
    %356 = vmatprep.subr.bf16.mxu0 %v254
    %357 = vmatpush1.bf16.msra.mxu0 %v253
    %358 = vmatprep.subr.bf16.mxu0 %v258
    %359 = vmatpush1.bf16.msra.mxu0 %v257
    %360 = vmatprep.subr.bf16.mxu0 %v262
    %361 = vmatpush1.bf16.msra.mxu0 %v261
    %362 = vmatprep.subr.bf16.mxu0 %v266
    %363 = vmatpush1.bf16.msra.mxu0 %v265
    %364 = vmatprep.subr.bf16.mxu0 %v270
    %365 = vmatpush1.bf16.msra.mxu0 %v269
    %366 = vmatprep.subr.bf16.mxu0 %v274
    %367 = vmatpush1.bf16.msra.mxu0 %v273
    %368 = vmatprep.subr.bf16.mxu0 %v278
    %369 = vmatpush1.bf16.msra.mxu0 %v277
    %370 = vmatprep.subr.bf16.mxu0 %v282
    %371 = vmatpush1.bf16.msra.mxu0 %v281
    %372 = vmatprep.subr.bf16.mxu0 0
    %373 = vmatpush1.bf16.msra.mxu0 0
    %374 = vmatprep.subr.bf16.mxu0 0
    %375 = vmatpush1.bf16.msra.mxu0 0
    %376 = vmatprep.subr.bf16.mxu0 0
    %377 = vmatpush1.bf16.msra.mxu0 0
    %378 = vmatprep.subr.bf16.mxu0 0
    %379 = vmatpush1.bf16.msra.mxu0 0
    %380 = vmatprep.subr.bf16.mxu0 0
    %381 = vmatpush1.bf16.msra.mxu0 0
    %382 = vmatprep.subr.bf16.mxu0 0
    %383 = vmatpush1.bf16.msra.mxu0 0
    %384 = vmatprep.subr.bf16.mxu0 0
    %385 = vmatpush1.bf16.msra.mxu0 0
    %386 = vmatprep.subr.bf16.mxu0 0
    %387 = vmatpush1.bf16.msra.mxu0 0
    %388 = vmatprep.mubr.bf16.mxu0 0
    %389 = vmatmul.mubr.bf16.gmra.mrb[0].mxu0 %v100
    %v390 = vpop.f32.mrb[0].mxu0
    %v391 = vadd.f32 %v146, %v390
    %v392 = vpop.f32.mrb[0].mxu0
    %v393 = vadd.f32 %v150, %v392
    %v394 = vpop.f32.mrb[0].mxu0
    %v395 = vpop.f32.mrb[0].mxu0
    %396 = vdwg.mxu0
    %v397 = vmax.f32 %v350, 0.0
    %v398 = vmax.f32 %v352, 0.0
    %v399 = vmax.f32 %v391, 0.0
    %v400 = vmax.f32 %v393, 0.0
    %v401 = vpack.c.bf16 %v397, %v397
    %v402 = vpack.c.bf16 %v398, %v398
    %v403 = vpack.c.bf16 %v399, %v399
    %v404 = vpack.c.bf16 %v400, %v400
    %v405 = vld [vmem:[#allocation7] sm:$0xff]
    %v406 = vld [vmem:[#allocation7 + $0x8] sm:$0xff]
    %v407 = vld [vmem:[#allocation7 + $0x10] sm:$0xff]
    %v408 = vld [vmem:[#allocation7 + $0x18] sm:$0xff]
    %v409 = vld [vmem:[#allocation7 + $0x20] sm:$0xff]
    %v410 = vld [vmem:[#allocation7 + $0x28] sm:$0xff]
    %v411 = vld [vmem:[#allocation7 + $0x30] sm:$0xff]
    %v412 = vld [vmem:[#allocation7 + $0x38] sm:$0xff]
    %v413 = vld [vmem:[#allocation7 + $0x40] sm:$0xff]
    %v414 = vld [vmem:[#allocation7 + $0x48] sm:$0xff]
    %v415 = vld [vmem:[#allocation7 + $0x50] sm:$0xff]
    %v416 = vld [vmem:[#allocation7 + $0x58] sm:$0xff]
    %v417 = vld [vmem:[#allocation7 + $0x60] sm:$0xff]
    %v418 = vld [vmem:[#allocation7 + $0x68] sm:$0xff]
    %v419 = vld [vmem:[#allocation7 + $0x70] sm:$0xff]
    %v420 = vld [vmem:[#allocation7 + $0x78] sm:$0xff]
    %v421 = vld [vmem:[#allocation7 + $0x80] sm:$0xff]
    %v422 = vld [vmem:[#allocation7 + $0x88] sm:$0xff]
    %v423 = vld [vmem:[#allocation7 + $0x90] sm:$0xff]
    %v424 = vld [vmem:[#allocation7 + $0x98] sm:$0xff]
    %v425 = vld [vmem:[#allocation7 + $0xa0] sm:$0xff]
    %v426 = vld [vmem:[#allocation7 + $0xa8] sm:$0xff]
    %v427 = vld [vmem:[#allocation7 + $0xb0] sm:$0xff]
    %v428 = vld [vmem:[#allocation7 + $0xb8] sm:$0xff]
    %v429 = vld [vmem:[#allocation7 + $0xc0] sm:$0xff]
    %v430 = vld [vmem:[#allocation7 + $0xc8] sm:$0xff]
    %v431 = vld [vmem:[#allocation7 + $0xd0] sm:$0xff]
    %v432 = vld [vmem:[#allocation7 + $0xd8] sm:$0xff]
    %v433 = vld [vmem:[#allocation7 + $0xe0] sm:$0xff]
    %v434 = vld [vmem:[#allocation7 + $0xe8] sm:$0xff]
    %v435 = vld [vmem:[#allocation7 + $0xf0] sm:$0xff]
    %v436 = vld [vmem:[#allocation7 + $0xf8] sm:$0xff]
    %v437 = vld [vmem:[#allocation7 + $0x100] sm:$0xff]
    %v438 = vld [vmem:[#allocation7 + $0x108] sm:$0xff]
    %v439 = vld [vmem:[#allocation7 + $0x110] sm:$0xff]
    %v440 = vld [vmem:[#allocation7 + $0x118] sm:$0xff]
    %v441 = vld [vmem:[#allocation7 + $0x120] sm:$0xff]
    %v442 = vld [vmem:[#allocation7 + $0x128] sm:$0xff]
    %v443 = vld [vmem:[#allocation7 + $0x130] sm:$0xff]
    %v444 = vld [vmem:[#allocation7 + $0x138] sm:$0xff]
    %v445 = vld [vmem:[#allocation7 + $0x140] sm:$0xff]
    %v446 = vld [vmem:[#allocation7 + $0x148] sm:$0xff]
    %v447 = vld [vmem:[#allocation7 + $0x150] sm:$0xff]
    %v448 = vld [vmem:[#allocation7 + $0x158] sm:$0xff]
    %v449 = vld [vmem:[#allocation7 + $0x160] sm:$0xff]
    %v450 = vld [vmem:[#allocation7 + $0x168] sm:$0xff]
    %v451 = vld [vmem:[#allocation7 + $0x170] sm:$0xff]
    %v452 = vld [vmem:[#allocation7 + $0x178] sm:$0xff]
    %v453 = vld [vmem:[#allocation7 + $0x180] sm:$0xff]
    %v454 = vld [vmem:[#allocation7 + $0x188] sm:$0xff]
    %v455 = vld [vmem:[#allocation7 + $0x190] sm:$0xff]
    %v456 = vld [vmem:[#allocation7 + $0x198] sm:$0xff]
    %v457 = vld [vmem:[#allocation7 + $0x1a0] sm:$0xff]
    %v458 = vld [vmem:[#allocation7 + $0x1a8] sm:$0xff]
    %v459 = vld [vmem:[#allocation7 + $0x1b0] sm:$0xff]
    %v460 = vld [vmem:[#allocation7 + $0x1b8] sm:$0xff]
    %v461 = vld [vmem:[#allocation7 + $0x1c0] sm:$0xff]
    %v462 = vld [vmem:[#allocation7 + $0x1c8] sm:$0xff]
    %v463 = vld [vmem:[#allocation7 + $0x1d0] sm:$0xff]
    %v464 = vld [vmem:[#allocation7 + $0x1d8] sm:$0xff]
    %v465 = vld [vmem:[#allocation7 + $0x1e0] sm:$0xff]
    %v466 = vld [vmem:[#allocation7 + $0x1e8] sm:$0xff]
    %v467 = vld [vmem:[#allocation7 + $0x1f0] sm:$0xff]
    %v468 = vld [vmem:[#allocation7 + $0x1f8] sm:$0xff]
    %v469 = vld [vmem:[%s4] sm:$0x3]
    %v471 = vlaneseq
    %v472 = vshrl.u32 %v471, 7
    %v473 = vsub.s32 0, %v472
    %v474 = vrot.slane %v469, %v473
    %v475 = vlaneseq
    %v476 = vshrl.u32 %v475, 7
    %v477 = vsub.s32 1, %v476
    %v478 = vrot.slane %v469, %v477
    %v545 = vunpack.c.l.b16 %v405
    %v546 = vunpack.c.h.b16 %v405
    %v547 = vunpack.c.l.b16 %v406
    %v548 = vunpack.c.h.b16 %v406
    %v549 = vunpack.c.l.b16 %v407
    %v550 = vunpack.c.h.b16 %v407
    %v551 = vunpack.c.l.b16 %v408
    %v552 = vunpack.c.h.b16 %v408
    %v553 = vunpack.c.l.b16 %v409
    %v554 = vunpack.c.h.b16 %v409
    %v555 = vunpack.c.l.b16 %v410
    %v556 = vunpack.c.h.b16 %v410
    %v557 = vunpack.c.l.b16 %v411
    %v558 = vunpack.c.h.b16 %v411
    %v559 = vunpack.c.l.b16 %v412
    %v560 = vunpack.c.h.b16 %v412
    %v561 = vunpack.c.l.b16 %v413
    %v562 = vunpack.c.h.b16 %v413
    %v563 = vunpack.c.l.b16 %v414
    %v564 = vunpack.c.h.b16 %v414
    %v565 = vunpack.c.l.b16 %v415
    %v566 = vunpack.c.h.b16 %v415
    %v567 = vunpack.c.l.b16 %v416
    %v568 = vunpack.c.h.b16 %v416
    %v569 = vunpack.c.l.b16 %v417
    %v570 = vunpack.c.h.b16 %v417
    %v571 = vunpack.c.l.b16 %v418
    %v572 = vunpack.c.h.b16 %v418
    %v573 = vunpack.c.l.b16 %v419
    %v574 = vunpack.c.h.b16 %v419
    %v575 = vunpack.c.l.b16 %v420
    %v576 = vunpack.c.h.b16 %v420
    %v577 = vunpack.c.l.b16 %v421
    %v578 = vunpack.c.h.b16 %v421
    %v579 = vunpack.c.l.b16 %v422
    %v580 = vunpack.c.h.b16 %v422
    %v581 = vunpack.c.l.b16 %v423
    %v582 = vunpack.c.h.b16 %v423
    %v583 = vunpack.c.l.b16 %v424
    %v584 = vunpack.c.h.b16 %v424
    %v585 = vunpack.c.l.b16 %v425
    %v586 = vunpack.c.h.b16 %v425
    %v587 = vunpack.c.l.b16 %v426
    %v588 = vunpack.c.h.b16 %v426
    %v589 = vunpack.c.l.b16 %v427
    %v590 = vunpack.c.h.b16 %v427
    %v591 = vunpack.c.l.b16 %v428
    %v592 = vunpack.c.h.b16 %v428
    %v593 = vunpack.c.l.b16 %v429
    %v594 = vunpack.c.h.b16 %v429
    %v595 = vunpack.c.l.b16 %v430
    %v596 = vunpack.c.h.b16 %v430
    %v597 = vunpack.c.l.b16 %v431
    %v598 = vunpack.c.h.b16 %v431
    %v599 = vunpack.c.l.b16 %v432
    %v600 = vunpack.c.h.b16 %v432
    %v601 = vunpack.c.l.b16 %v433
    %v602 = vunpack.c.h.b16 %v433
    %v603 = vunpack.c.l.b16 %v434
    %v604 = vunpack.c.h.b16 %v434
    %v605 = vunpack.c.l.b16 %v435
    %v606 = vunpack.c.h.b16 %v435
    %v607 = vunpack.c.l.b16 %v436
    %v608 = vunpack.c.h.b16 %v436
    %v609 = vunpack.c.l.b16 %v437
    %v610 = vunpack.c.h.b16 %v437
    %v611 = vunpack.c.l.b16 %v438
    %v612 = vunpack.c.h.b16 %v438
    %v613 = vunpack.c.l.b16 %v439
    %v614 = vunpack.c.h.b16 %v439
    %v615 = vunpack.c.l.b16 %v440
    %v616 = vunpack.c.h.b16 %v440
    %v617 = vunpack.c.l.b16 %v441
    %v618 = vunpack.c.h.b16 %v441
    %v619 = vunpack.c.l.b16 %v442
    %v620 = vunpack.c.h.b16 %v442
    %v621 = vunpack.c.l.b16 %v443
    %v622 = vunpack.c.h.b16 %v443
    %v623 = vunpack.c.l.b16 %v444
    %v624 = vunpack.c.h.b16 %v444
    %v625 = vunpack.c.l.b16 %v445
    %v626 = vunpack.c.h.b16 %v445
    %v627 = vunpack.c.l.b16 %v446
    %v628 = vunpack.c.h.b16 %v446
    %v629 = vunpack.c.l.b16 %v447
    %v630 = vunpack.c.h.b16 %v447
    %v631 = vunpack.c.l.b16 %v448
    %v632 = vunpack.c.h.b16 %v448
    %v633 = vunpack.c.l.b16 %v449
    %v634 = vunpack.c.h.b16 %v449
    %v635 = vunpack.c.l.b16 %v450
    %v636 = vunpack.c.h.b16 %v450
    %v637 = vunpack.c.l.b16 %v451
    %v638 = vunpack.c.h.b16 %v451
    %v639 = vunpack.c.l.b16 %v452
    %v640 = vunpack.c.h.b16 %v452
    %v641 = vunpack.c.l.b16 %v453
    %v642 = vunpack.c.h.b16 %v453
    %v643 = vunpack.c.l.b16 %v454
    %v644 = vunpack.c.h.b16 %v454
    %v645 = vunpack.c.l.b16 %v455
    %v646 = vunpack.c.h.b16 %v455
    %v647 = vunpack.c.l.b16 %v456
    %v648 = vunpack.c.h.b16 %v456
    %v649 = vunpack.c.l.b16 %v457
    %v650 = vunpack.c.h.b16 %v457
    %v651 = vunpack.c.l.b16 %v458
    %v652 = vunpack.c.h.b16 %v458
    %v653 = vunpack.c.l.b16 %v459
    %v654 = vunpack.c.h.b16 %v459
    %v655 = vunpack.c.l.b16 %v460
    %v656 = vunpack.c.h.b16 %v460
    %v657 = vunpack.c.l.b16 %v461
    %v658 = vunpack.c.h.b16 %v461
    %v659 = vunpack.c.l.b16 %v462
    %v660 = vunpack.c.h.b16 %v462
    %v661 = vunpack.c.l.b16 %v463
    %v662 = vunpack.c.h.b16 %v463
    %v663 = vunpack.c.l.b16 %v464
    %v664 = vunpack.c.h.b16 %v464
    %v665 = vunpack.c.l.b16 %v465
    %v666 = vunpack.c.h.b16 %v465
    %v667 = vunpack.c.l.b16 %v466
    %v668 = vunpack.c.h.b16 %v466
    %v669 = vunpack.c.l.b16 %v467
    %v670 = vunpack.c.h.b16 %v467
    %v671 = vunpack.c.l.b16 %v468
    %v672 = vunpack.c.h.b16 %v468
    %v673 = vpack.c.b16 %v547, %v545
    %v674 = vpack.c.b16 %v548, %v546
    %v675 = vpack.c.b16 %v551, %v549
    %v676 = vpack.c.b16 %v552, %v550
    %v677 = vpack.c.b16 %v555, %v553
    %v678 = vpack.c.b16 %v556, %v554
    %v679 = vpack.c.b16 %v559, %v557
    %v680 = vpack.c.b16 %v560, %v558
    %v681 = vpack.c.b16 %v563, %v561
    %v682 = vpack.c.b16 %v564, %v562
    %v683 = vpack.c.b16 %v567, %v565
    %v684 = vpack.c.b16 %v568, %v566
    %v685 = vpack.c.b16 %v571, %v569
    %v686 = vpack.c.b16 %v572, %v570
    %v687 = vpack.c.b16 %v575, %v573
    %v688 = vpack.c.b16 %v576, %v574
    %v689 = vpack.c.b16 %v579, %v577
    %v690 = vpack.c.b16 %v580, %v578
    %v691 = vpack.c.b16 %v583, %v581
    %v692 = vpack.c.b16 %v584, %v582
    %v693 = vpack.c.b16 %v587, %v585
    %v694 = vpack.c.b16 %v588, %v586
    %v695 = vpack.c.b16 %v591, %v589
    %v696 = vpack.c.b16 %v592, %v590
    %v697 = vpack.c.b16 %v595, %v593
    %v698 = vpack.c.b16 %v596, %v594
    %v699 = vpack.c.b16 %v599, %v597
    %v700 = vpack.c.b16 %v600, %v598
    %v701 = vpack.c.b16 %v603, %v601
    %v702 = vpack.c.b16 %v604, %v602
    %v703 = vpack.c.b16 %v607, %v605
    %v704 = vpack.c.b16 %v608, %v606
    %v705 = vpack.c.b16 %v611, %v609
    %v706 = vpack.c.b16 %v612, %v610
    %v707 = vpack.c.b16 %v615, %v613
    %v708 = vpack.c.b16 %v616, %v614
    %v709 = vpack.c.b16 %v619, %v617
    %v710 = vpack.c.b16 %v620, %v618
    %v711 = vpack.c.b16 %v623, %v621
    %v712 = vpack.c.b16 %v624, %v622
    %v713 = vpack.c.b16 %v627, %v625
    %v714 = vpack.c.b16 %v628, %v626
    %v715 = vpack.c.b16 %v631, %v629
    %v716 = vpack.c.b16 %v632, %v630
    %v717 = vpack.c.b16 %v635, %v633
    %v718 = vpack.c.b16 %v636, %v634
    %v719 = vpack.c.b16 %v639, %v637
    %v720 = vpack.c.b16 %v640, %v638
    %v721 = vpack.c.b16 %v643, %v641
    %v722 = vpack.c.b16 %v644, %v642
    %v723 = vpack.c.b16 %v647, %v645
    %v724 = vpack.c.b16 %v648, %v646
    %v725 = vpack.c.b16 %v651, %v649
    %v726 = vpack.c.b16 %v652, %v650
    %v727 = vpack.c.b16 %v655, %v653
    %v728 = vpack.c.b16 %v656, %v654
    %v729 = vpack.c.b16 %v659, %v657
    %v730 = vpack.c.b16 %v660, %v658
    %v731 = vpack.c.b16 %v663, %v661
    %v732 = vpack.c.b16 %v664, %v662
    %v733 = vpack.c.b16 %v667, %v665
    %v734 = vpack.c.b16 %v668, %v666
    %v735 = vpack.c.b16 %v671, %v669
    %v736 = vpack.c.b16 %v672, %v670
    %801 = vmatprep.subr.bf16.mxu0 %v674
    %802 = vmatpush1.bf16.msra.mxu0 %v673
    %803 = vmatprep.subr.bf16.mxu0 %v676
    %804 = vmatpush1.bf16.msra.mxu0 %v675
    %805 = vmatprep.subr.bf16.mxu0 %v678
    %806 = vmatpush1.bf16.msra.mxu0 %v677
    %807 = vmatprep.subr.bf16.mxu0 %v680
    %808 = vmatpush1.bf16.msra.mxu0 %v679
    %809 = vmatprep.subr.bf16.mxu0 %v682
    %810 = vmatpush1.bf16.msra.mxu0 %v681
    %811 = vmatprep.subr.bf16.mxu0 %v684
    %812 = vmatpush1.bf16.msra.mxu0 %v683
    %813 = vmatprep.subr.bf16.mxu0 %v686
    %814 = vmatpush1.bf16.msra.mxu0 %v685
    %815 = vmatprep.subr.bf16.mxu0 %v688
    %816 = vmatpush1.bf16.msra.mxu0 %v687
    %817 = vmatprep.subr.bf16.mxu0 %v690
    %818 = vmatpush1.bf16.msra.mxu0 %v689
    %819 = vmatprep.subr.bf16.mxu0 %v692
    %820 = vmatpush1.bf16.msra.mxu0 %v691
    %821 = vmatprep.subr.bf16.mxu0 %v694
    %822 = vmatpush1.bf16.msra.mxu0 %v693
    %823 = vmatprep.subr.bf16.mxu0 %v696
    %824 = vmatpush1.bf16.msra.mxu0 %v695
    %825 = vmatprep.subr.bf16.mxu0 %v698
    %826 = vmatpush1.bf16.msra.mxu0 %v697
    %827 = vmatprep.subr.bf16.mxu0 %v700
    %828 = vmatpush1.bf16.msra.mxu0 %v699
    %829 = vmatprep.subr.bf16.mxu0 %v702
    %830 = vmatpush1.bf16.msra.mxu0 %v701
    %831 = vmatprep.subr.bf16.mxu0 %v704
    %832 = vmatpush1.bf16.msra.mxu0 %v703
    %833 = vmatprep.mubr.bf16.mxu0 %v402
    %834 = vmatmul.mubr.bf16.gmra.mrb[0].mxu0 %v401
    %v835 = vpop.f32.mrb[0].mxu0
    %v836 = vadd.f32 %v474, %v835
    %v837 = vpop.f32.mrb[0].mxu0
    %v838 = vadd.f32 %v478, %v837
    %v839 = vpop.f32.mrb[0].mxu0
    %v840 = vpop.f32.mrb[0].mxu0
    %841 = vdwg.mxu0
    %842 = vmatprep.subr.bf16.mxu0 %v706
    %843 = vmatpush1.bf16.msra.mxu0 %v705
    %844 = vmatprep.subr.bf16.mxu0 %v708
    %845 = vmatpush1.bf16.msra.mxu0 %v707
    %846 = vmatprep.subr.bf16.mxu0 %v710
    %847 = vmatpush1.bf16.msra.mxu0 %v709
    %848 = vmatprep.subr.bf16.mxu0 %v712
    %849 = vmatpush1.bf16.msra.mxu0 %v711
    %850 = vmatprep.subr.bf16.mxu0 %v714
    %851 = vmatpush1.bf16.msra.mxu0 %v713
    %852 = vmatprep.subr.bf16.mxu0 %v716
    %853 = vmatpush1.bf16.msra.mxu0 %v715
    %854 = vmatprep.subr.bf16.mxu0 %v718
    %855 = vmatpush1.bf16.msra.mxu0 %v717
    %856 = vmatprep.subr.bf16.mxu0 %v720
    %857 = vmatpush1.bf16.msra.mxu0 %v719
    %858 = vmatprep.subr.bf16.mxu0 %v722
    %859 = vmatpush1.bf16.msra.mxu0 %v721
    %860 = vmatprep.subr.bf16.mxu0 %v724
    %861 = vmatpush1.bf16.msra.mxu0 %v723
    %862 = vmatprep.subr.bf16.mxu0 %v726
    %863 = vmatpush1.bf16.msra.mxu0 %v725
    %864 = vmatprep.subr.bf16.mxu0 %v728
    %865 = vmatpush1.bf16.msra.mxu0 %v727
    %866 = vmatprep.subr.bf16.mxu0 %v730
    %867 = vmatpush1.bf16.msra.mxu0 %v729
    %868 = vmatprep.subr.bf16.mxu0 %v732
    %869 = vmatpush1.bf16.msra.mxu0 %v731
    %870 = vmatprep.subr.bf16.mxu0 %v734
    %871 = vmatpush1.bf16.msra.mxu0 %v733
    %872 = vmatprep.subr.bf16.mxu0 %v736
    %873 = vmatpush1.bf16.msra.mxu0 %v735
    %874 = vmatprep.mubr.bf16.mxu0 %v404
    %875 = vmatmul.mubr.bf16.gmra.mrb[0].mxu0 %v403
    %v876 = vpop.f32.mrb[0].mxu0
    %v877 = vadd.f32 %v836, %v876
    %v878 = vpop.f32.mrb[0].mxu0
    %v879 = vadd.f32 %v838, %v878
    %v880 = vpop.f32.mrb[0].mxu0
    %v881 = vpop.f32.mrb[0].mxu0
    %882 = vdwg.mxu0
    %v883 = vmax.f32 %v877, 0.0
    %v884 = vmax.f32 %v879, 0.0
    %v885 = vpack.c.bf16 %v883, %v883
    %v886 = vpack.c.bf16 %v884, %v884
    %v887 = vld [vmem:[#allocation8] sm:$0xf]
    %v888 = vld [vmem:[#allocation8 + $0x4] sm:$0xf]
    %v889 = vld [vmem:[#allocation8 + $0x8] sm:$0xf]
    %v890 = vld [vmem:[#allocation8 + $0xc] sm:$0xf]
    %v891 = vld [vmem:[#allocation8 + $0x10] sm:$0xf]
    %v892 = vld [vmem:[#allocation8 + $0x14] sm:$0xf]
    %v893 = vld [vmem:[#allocation8 + $0x18] sm:$0xf]
    %v894 = vld [vmem:[#allocation8 + $0x1c] sm:$0xf]
    %v895 = vld [vmem:[#allocation8 + $0x20] sm:$0xf]
    %v896 = vld [vmem:[#allocation8 + $0x24] sm:$0xf]
    %v897 = vld [vmem:[#allocation8 + $0x28] sm:$0xf]
    %v898 = vld [vmem:[#allocation8 + $0x2c] sm:$0xf]
    %v899 = vld [vmem:[#allocation8 + $0x30] sm:$0xf]
    %v900 = vld [vmem:[#allocation8 + $0x34] sm:$0xf]
    %v901 = vld [vmem:[#allocation8 + $0x38] sm:$0xf]
    %v902 = vld [vmem:[#allocation8 + $0x3c] sm:$0xf]
    %v903 = vld [vmem:[#allocation8 + $0x40] sm:$0xf]
    %v904 = vld [vmem:[#allocation8 + $0x44] sm:$0xf]
    %v905 = vld [vmem:[#allocation8 + $0x48] sm:$0xf]
    %v906 = vld [vmem:[#allocation8 + $0x4c] sm:$0xf]
    %v907 = vld [vmem:[#allocation8 + $0x50] sm:$0xf]
    %v908 = vld [vmem:[#allocation8 + $0x54] sm:$0xf]
    %v909 = vld [vmem:[#allocation8 + $0x58] sm:$0xf]
    %v910 = vld [vmem:[#allocation8 + $0x5c] sm:$0xf]
    %v911 = vld [vmem:[#allocation8 + $0x60] sm:$0xf]
    %v912 = vld [vmem:[#allocation8 + $0x64] sm:$0xf]
    %v913 = vld [vmem:[#allocation8 + $0x68] sm:$0xf]
    %v914 = vld [vmem:[#allocation8 + $0x6c] sm:$0xf]
    %v915 = vld [vmem:[#allocation8 + $0x70] sm:$0xf]
    %v916 = vld [vmem:[#allocation8 + $0x74] sm:$0xf]
    %v917 = vld [vmem:[#allocation8 + $0x78] sm:$0xf]
    %v918 = vld [vmem:[#allocation8 + $0x7c] sm:$0xf]
    %v919 = vld [vmem:[%s6] sm:$0x1]
    %v921 = vlaneseq
    %v922 = vshrl.u32 %v921, 7
    %v923 = vsub.s32 0, %v922
    %v924 = vrot.slane %v919, %v923
    %v958 = vunpack.c.l.b16 %v887
    %v959 = vunpack.c.l.b16 %v888
    %v960 = vunpack.c.l.b16 %v889
    %v961 = vunpack.c.l.b16 %v890
    %v962 = vunpack.c.l.b16 %v891
    %v963 = vunpack.c.l.b16 %v892
    %v964 = vunpack.c.l.b16 %v893
    %v965 = vunpack.c.l.b16 %v894
    %v966 = vunpack.c.l.b16 %v895
    %v967 = vunpack.c.l.b16 %v896
    %v968 = vunpack.c.l.b16 %v897
    %v969 = vunpack.c.l.b16 %v898
    %v970 = vunpack.c.l.b16 %v899
    %v971 = vunpack.c.l.b16 %v900
    %v972 = vunpack.c.l.b16 %v901
    %v973 = vunpack.c.l.b16 %v902
    %v974 = vunpack.c.l.b16 %v903
    %v975 = vunpack.c.l.b16 %v904
    %v976 = vunpack.c.l.b16 %v905
    %v977 = vunpack.c.l.b16 %v906
    %v978 = vunpack.c.l.b16 %v907
    %v979 = vunpack.c.l.b16 %v908
    %v980 = vunpack.c.l.b16 %v909
    %v981 = vunpack.c.l.b16 %v910
    %v982 = vunpack.c.l.b16 %v911
    %v983 = vunpack.c.l.b16 %v912
    %v984 = vunpack.c.l.b16 %v913
    %v985 = vunpack.c.l.b16 %v914
    %v986 = vunpack.c.l.b16 %v915
    %v987 = vunpack.c.l.b16 %v916
    %v988 = vunpack.c.l.b16 %v917
    %v989 = vunpack.c.l.b16 %v918
    %v990 = vpack.c.b16 %v959, %v958
    %v991 = vpack.c.b16 %v961, %v960
    %v992 = vpack.c.b16 %v963, %v962
    %v993 = vpack.c.b16 %v965, %v964
    %v994 = vpack.c.b16 %v967, %v966
    %v995 = vpack.c.b16 %v969, %v968
    %v996 = vpack.c.b16 %v971, %v970
    %v997 = vpack.c.b16 %v973, %v972
    %v998 = vpack.c.b16 %v975, %v974
    %v999 = vpack.c.b16 %v977, %v976
    %v1000 = vpack.c.b16 %v979, %v978
    %v1001 = vpack.c.b16 %v981, %v980
    %v1002 = vpack.c.b16 %v983, %v982
    %v1003 = vpack.c.b16 %v985, %v984
    %v1004 = vpack.c.b16 %v987, %v986
    %v1005 = vpack.c.b16 %v989, %v988
    %1022 = vmatprep.subr.bf16.mxu0 0
    %1023 = vmatpush1.bf16.msra.mxu0 %v990
    %1024 = vmatprep.subr.bf16.mxu0 0
    %1025 = vmatpush1.bf16.msra.mxu0 %v991
    %1026 = vmatprep.subr.bf16.mxu0 0
    %1027 = vmatpush1.bf16.msra.mxu0 %v992
    %1028 = vmatprep.subr.bf16.mxu0 0
    %1029 = vmatpush1.bf16.msra.mxu0 %v993
    %1030 = vmatprep.subr.bf16.mxu0 0
    %1031 = vmatpush1.bf16.msra.mxu0 %v994
    %1032 = vmatprep.subr.bf16.mxu0 0
    %1033 = vmatpush1.bf16.msra.mxu0 %v995
    %1034 = vmatprep.subr.bf16.mxu0 0
    %1035 = vmatpush1.bf16.msra.mxu0 %v996
    %1036 = vmatprep.subr.bf16.mxu0 0
    %1037 = vmatpush1.bf16.msra.mxu0 %v997
    %1038 = vmatprep.subr.bf16.mxu0 0
    %1039 = vmatpush1.bf16.msra.mxu0 %v998
    %1040 = vmatprep.subr.bf16.mxu0 0
    %1041 = vmatpush1.bf16.msra.mxu0 %v999
    %1042 = vmatprep.subr.bf16.mxu0 0
    %1043 = vmatpush1.bf16.msra.mxu0 %v1000
    %1044 = vmatprep.subr.bf16.mxu0 0
    %1045 = vmatpush1.bf16.msra.mxu0 %v1001
    %1046 = vmatprep.subr.bf16.mxu0 0
    %1047 = vmatpush1.bf16.msra.mxu0 %v1002
    %1048 = vmatprep.subr.bf16.mxu0 0
    %1049 = vmatpush1.bf16.msra.mxu0 %v1003
    %1050 = vmatprep.subr.bf16.mxu0 0
    %1051 = vmatpush1.bf16.msra.mxu0 %v1004
    %1052 = vmatprep.subr.bf16.mxu0 0
    %1053 = vmatpush1.bf16.msra.mxu0 %v1005
    %1054 = vmatprep.mubr.bf16.mxu0 %v886
    %1055 = vmatmul.mubr.bf16.gmra.mrb[0].mxu0 %v885
    %v1056 = vpop.f32.mrb[0].mxu0
    %v1057 = vadd.f32 %v924, %v1056
    %v1058 = vpop.f32.mrb[0].mxu0
    %v1059 = vpop.f32.mrb[0].mxu0
    %v1060 = vpop.f32.mrb[0].mxu0
    %1061 = vdwg.mxu0
    %v1062 = vmax.f32 %v1057, 0.0
    %v1063 = vpack.c.bf16 %v1062, %v1062
    %v1064 = vld [vmem:[#allocation10] sm:$0xf]
    %v1065 = vld [vmem:[#allocation10 + $0x4] sm:$0xf]
    %v1066 = vld [vmem:[#allocation10 + $0x8] sm:$0xf]
    %v1067 = vld [vmem:[#allocation10 + $0xc] sm:$0xf]
    %v1068 = vld [vmem:[#allocation10 + $0x10] sm:$0xf]
    %v1069 = vld [vmem:[#allocation10 + $0x14] sm:$0xf]
    %v1070 = vld [vmem:[#allocation10 + $0x18] sm:$0xf]
    %v1071 = vld [vmem:[#allocation10 + $0x1c] sm:$0xf]
    %v1072 = vld [vmem:[#allocation10 + $0x20] sm:$0xf]
    %v1073 = vld [vmem:[#allocation10 + $0x24] sm:$0xf]
    %v1074 = vld [vmem:[#allocation10 + $0x28] sm:$0xf]
    %v1075 = vld [vmem:[#allocation10 + $0x2c] sm:$0xf]
    %v1076 = vld [vmem:[#allocation10 + $0x30] sm:$0xf]
    %v1077 = vld [vmem:[#allocation10 + $0x34] sm:$0xf]
    %v1078 = vld [vmem:[#allocation10 + $0x38] sm:$0xf]
    %v1079 = vld [vmem:[#allocation10 + $0x3c] sm:$0xf]
    %v1080 = vld [vmem:[%s8] sm:$0x1]
    %v1082 = vlaneseq
    %v1083 = vshrl.u32 %v1082, 7
    %v1084 = vsub.s32 0, %v1083
    %v1085 = vrot.slane %v1080, %v1084
    %v1103 = vunpack.c.l.b16 %v1064
    %v1104 = vunpack.c.l.b16 %v1065
    %v1105 = vunpack.c.l.b16 %v1066
    %v1106 = vunpack.c.l.b16 %v1067
    %v1107 = vunpack.c.l.b16 %v1068
    %v1108 = vunpack.c.l.b16 %v1069
    %v1109 = vunpack.c.l.b16 %v1070
    %v1110 = vunpack.c.l.b16 %v1071
    %v1111 = vunpack.c.l.b16 %v1072
    %v1112 = vunpack.c.l.b16 %v1073
    %v1113 = vunpack.c.l.b16 %v1074
    %v1114 = vunpack.c.l.b16 %v1075
    %v1115 = vunpack.c.l.b16 %v1076
    %v1116 = vunpack.c.l.b16 %v1077
    %v1117 = vunpack.c.l.b16 %v1078
    %v1118 = vunpack.c.l.b16 %v1079
    %v1119 = vpack.c.b16 %v1104, %v1103
    %v1120 = vpack.c.b16 %v1106, %v1105
    %v1121 = vpack.c.b16 %v1108, %v1107
    %v1122 = vpack.c.b16 %v1110, %v1109
    %v1123 = vpack.c.b16 %v1112, %v1111
    %v1124 = vpack.c.b16 %v1114, %v1113
    %v1125 = vpack.c.b16 %v1116, %v1115
    %v1126 = vpack.c.b16 %v1118, %v1117
    %1135 = vmatprep.subr.bf16.mxu0 0
    %1136 = vmatpush1.bf16.msra.mxu0 %v1119
    %1137 = vmatprep.subr.bf16.mxu0 0
    %1138 = vmatpush1.bf16.msra.mxu0 %v1120
    %1139 = vmatprep.subr.bf16.mxu0 0
    %1140 = vmatpush1.bf16.msra.mxu0 %v1121
    %1141 = vmatprep.subr.bf16.mxu0 0
    %1142 = vmatpush1.bf16.msra.mxu0 %v1122
    %1143 = vmatprep.subr.bf16.mxu0 0
    %1144 = vmatpush1.bf16.msra.mxu0 %v1123
    %1145 = vmatprep.subr.bf16.mxu0 0
    %1146 = vmatpush1.bf16.msra.mxu0 %v1124
    %1147 = vmatprep.subr.bf16.mxu0 0
    %1148 = vmatpush1.bf16.msra.mxu0 %v1125
    %1149 = vmatprep.subr.bf16.mxu0 0
    %1150 = vmatpush1.bf16.msra.mxu0 %v1126
    %1151 = vmatprep.subr.bf16.mxu0 0
    %1152 = vmatpush1.bf16.msra.mxu0 0
    %1153 = vmatprep.subr.bf16.mxu0 0
    %1154 = vmatpush1.bf16.msra.mxu0 0
    %1155 = vmatprep.subr.bf16.mxu0 0
    %1156 = vmatpush1.bf16.msra.mxu0 0
    %1157 = vmatprep.subr.bf16.mxu0 0
    %1158 = vmatpush1.bf16.msra.mxu0 0
    %1159 = vmatprep.subr.bf16.mxu0 0
    %1160 = vmatpush1.bf16.msra.mxu0 0
    %1161 = vmatprep.subr.bf16.mxu0 0
    %1162 = vmatpush1.bf16.msra.mxu0 0
    %1163 = vmatprep.subr.bf16.mxu0 0
    %1164 = vmatpush1.bf16.msra.mxu0 0
    %1165 = vmatprep.subr.bf16.mxu0 0
    %1166 = vmatpush1.bf16.msra.mxu0 0
    %1167 = vmatprep.mubr.bf16.mxu0 0
    %1168 = vmatmul.mubr.bf16.gmra.mrb[0].mxu0 %v1063
    %v1169 = vpop.f32.mrb[0].mxu0
    %v1170 = vadd.f32 %v1085, %v1169
    %v1171 = vpop.f32.mrb[0].mxu0
    %v1172 = vpop.f32.mrb[0].mxu0
    %v1173 = vpop.f32.mrb[0].mxu0
    %1174 = vdwg.mxu0
    %1175 = vst [vmem:[#allocation11] sm:$0xff] %v1170
    // Predicated region
    $region58: #{tpu_custom_call.1} parent=1 // pred_check
      _
    $region59: #{tpu_custom_call.1} parent=1 // pred_check_branch
      %1177 = sbr.rel (0) target = $region61
    $region60: #{tpu_custom_call.1} parent=1 // pred_region
      %s1179 = ssub.s32 128, 128
      %1180 = vsyncadd [#allocation4], %s1179
      %s1182 = sshll.u32 [#allocation11], 4
      %s1183 = int_to_ptr.vmem [resolvable:$true] %s1182
      %1185 = dma.vmem_to_hbm [thread:$0]  %s1183, 128, %s9, [#allocation4]
    $region61: #{tpu_custom_call.1} parent=1 // pred_fallthru
      _
    // Predicated region
    $region62: #{tpu_custom_call.1} parent=1 // pred_check
      _
    $region63: #{tpu_custom_call.1} parent=1 // pred_check_branch
      %1187 = sbr.rel (0) target = $region65
    $region64: #{tpu_custom_call.1} parent=1 // pred_region
      %1188 = dma.done [#allocation4], 128
    $region65: #{tpu_custom_call.1} parent=1 // pred_fallthru
      _
    %1189 = vsyncpa [#allocation3], 1
    %1190 = vsyncpa [#allocation6], 1
    %1191 = vsyncpa [#allocation9], 1
    %1192 = vsyncpa [#allocation4], 1

</llo_original>
